<compile_context>
chip_gen: v6e
topology: v6e:2x2x1
jax: 0.10.0
libtpu: 0.0.40
codegen_flags: <defaults>
</compile_context>

<pallas_src>
import functools

import jax
import jax.numpy as jnp
import numpy as np
from jax import lax
from jax.experimental import pallas as pl
from jax.experimental.pallas import tpu as pltpu


def _cdiv(a, b):
    return -(-a // b)


def _round_up(x, m):
    return _cdiv(x, m) * m


def _vmem_bytes_per_step(T_L, Cin, Cout, K, in_bytes):
    """Rough per-grid-step VMEM footprint (double-buffered streams + kernel temps)."""
    C2in, C2out = 2 * Cin, 2 * Cout
    halo = 128 if K > 1 else 0
    streams = 2 * C2in * (T_L + halo) * in_bytes          # x_r/x_i mains + halos, 2 bufs
    streams += 2 * C2out * T_L * 4                        # out_r/out_i, 2 bufs, f32
    temps = C2in * (T_L + halo) * in_bytes                # stacked window
    temps += K * C2in * T_L * in_bytes                    # im2col patches
    temps += C2out * T_L * 4                              # f32 accumulators
    weights = 2 * (C2out * K * C2in * in_bytes + C2out * 4)
    return streams + temps + weights


def _pick_l_tile(L_out, Cin, Cout, K, in_bytes, *, t_l_cap, vmem_budget, min_l_tiles):
    # Biggest tile we want given the output length, while keeping >= min_l_tiles
    # grid steps on the L axis (shards across v7x's 2 TensorCores for small N).
    want = max(_round_up(_cdiv(L_out, max(min_l_tiles, 1)), 128), 128)
    t = max(min(_round_up(t_l_cap, 128), want), 128)
    while t > 128 and _vmem_bytes_per_step(t, Cin, Cout, K, in_bytes) > vmem_budget:
        t -= 128
    return t


def _cconv1d_kernel(*refs, K, T_L, L_in, mask_tail):
    """One (batch, L-tile) grid step.

    refs (K > 1): xr, xr_halo, xi, xi_halo, w_r_rows, w_i_rows, b_r, b_i, out_r, out_i
    refs (K == 1): xr, xi, w_r_rows, w_i_rows, b_r, b_i, out_r, out_i

      xr/xi        : (Cin, T_L)        current input tile
      x*_halo      : (Cin, 128)        next 128 samples (K-1 tap halo)
      w_*_rows     : (Cout, K*2Cin)    block weights, taps folded into contraction
      b_*          : (Cout, 1)         f32 block bias
      out_*        : (Cout, T_L)       lane-dense output tile (partial tail masked by Pallas)
    """
    if K > 1:
        (xr_ref, xrh_ref, xi_ref, xih_ref,
         wr_ref, wi_ref, br_ref, bi_ref, or_ref, oi_ref) = refs
    else:
        xr_ref, xi_ref, wr_ref, wi_ref, br_ref, bi_ref, or_ref, oi_ref = refs

    xr = xr_ref[...]
    xi = xi_ref[...]
    if K > 1:
        xr = jnp.concatenate([xr, xrh_ref[:, :K - 1]], axis=1)   # (Cin, T_L+K-1)
        xi = jnp.concatenate([xi, xih_ref[:, :K - 1]], axis=1)
    win = jnp.concatenate([xr, xi], axis=0)                      # (2Cin, T_L+K-1)

    if mask_tail:
        # padding > 0: zero every lane whose global position is past the real
        # (left-padded) input -- implements the virtual right zero-padding and
        # neutralizes any garbage from partial / clamped edge blocks.
        pos = pl.program_id(1) * T_L + lax.broadcasted_iota(jnp.int32, win.shape, 1)
        win = jnp.where(pos < L_in, win, jnp.zeros_like(win))

    if K > 1:
        # im2col: static lane shifts stacked on the contraction (sublane) axis
        # -> one MXU matmul of depth K*2Cin.
        patches = jnp.concatenate([win[:, k:k + T_L] for k in range(K)], axis=0)
    else:
        patches = win

    # TODO(synk): for strict f32 bit-parity with PyTorch pass precision=HIGHEST
    # here (kernel is memory-bound so the extra MXU passes are free); default
    # precision already matches to ~1e-4 at these contraction depths.
    acc_r = jnp.dot(wr_ref[...], patches, preferred_element_type=jnp.float32)
    acc_i = jnp.dot(wi_ref[...], patches, preferred_element_type=jnp.float32)
    or_ref[...] = (acc_r + br_ref[...]).astype(or_ref.dtype)     # lane-dense store
    oi_ref[...] = (acc_i + bi_ref[...]).astype(oi_ref.dtype)


def complex_conv1d(x_r, x_i, w_r, w_i, b_r=None, b_i=None, *, stride=1, padding=0,
                   dilation=1, groups=1, compute_dtype=jnp.float32,
                   t_l_cap=8192, vmem_budget_bytes=14 << 20, min_l_tiles=4):
    """ComplexConv1d forward.  x_*: (N, Cin, L); w_*: (Cout, Cin, K); b_*: (Cout,)."""
    # TODO(synk): stride/dilation/groups != 1 and non-'zeros' padding modes are
    # not implemented (the ComplexConv1d defaults are 1/1/1/'zeros').
    assert stride == 1 and dilation == 1 and groups == 1
    N, Cin, L = x_r.shape
    assert x_i.shape == (N, Cin, L)
    Cout, Cin_w, K = w_r.shape
    assert Cin_w == Cin and w_i.shape == w_r.shape
    assert 1 <= K <= 129, "halo block is 128 lanes wide"
    L_out = L + 2 * padding - K + 1
    assert L_out >= 1

    if b_r is None:
        b_r = jnp.zeros((Cout,), jnp.float32)
    if b_i is None:
        b_i = jnp.zeros((Cout,), jnp.float32)

    # Only the LEFT conv padding is materialized; the virtual right padding and
    # the ragged tail are handled by in-kernel masking (no full padded copy).
    # TODO(synk): a fully copy-free padding>0 path would need a left-halo block.
    if padding > 0:
        x_r = jnp.pad(x_r, ((0, 0), (0, 0), (padding, 0)))
        x_i = jnp.pad(x_i, ((0, 0), (0, 0), (padding, 0)))
    L_in = L + padding

    x_r = x_r.astype(compute_dtype)
    x_i = x_i.astype(compute_dtype)

    # Block weights: patches row index is k*2Cin + c (x_r channels first).
    C2in = 2 * Cin
    wr_blk = jnp.concatenate([w_r, -w_i], axis=1)                # rows producing out_r
    wi_blk = jnp.concatenate([w_i, w_r], axis=1)                 # rows producing out_i
    wr_flat = jnp.transpose(wr_blk, (0, 2, 1)).reshape(Cout, K * C2in).astype(compute_dtype)
    wi_flat = jnp.transpose(wi_blk, (0, 2, 1)).reshape(Cout, K * C2in).astype(compute_dtype)
    br_big = (b_r - b_i).reshape(Cout, 1).astype(jnp.float32)
    bi_big = (b_r + b_i).reshape(Cout, 1).astype(jnp.float32)

    in_bytes = jnp.dtype(compute_dtype).itemsize
    T_L = _pick_l_tile(L_out, Cin, Cout, K, in_bytes, t_l_cap=t_l_cap,
                       vmem_budget=vmem_budget_bytes, min_l_tiles=min_l_tiles)
    d = T_L // 128
    n_lt = _cdiv(L_out, T_L)

    # Clamp edge block indices so no input block is ever fully out of bounds.
    # (Clamped blocks only ever feed lanes that are either masked in-kernel
    #  (padding>0) or dropped by the masked output store.)
    max_main_blk = (L_in - 1) // T_L
    max_halo_blk = (L_in - 1) // 128

    main_spec = pl.BlockSpec((None, Cin, T_L),
                             lambda n, j: (n, 0, jnp.minimum(j, max_main_blk)))
    halo_spec = pl.BlockSpec((None, Cin, 128),
                             lambda n, j: (n, 0, jnp.minimum((j + 1) * d, max_halo_blk)))
    w_spec = pl.BlockSpec((Cout, K * C2in), lambda n, j: (0, 0))
    b_spec = pl.BlockSpec((Cout, 1), lambda n, j: (0, 0))
    out_spec = pl.BlockSpec((None, Cout, T_L), lambda n, j: (n, 0, j))

    if K > 1:
        in_specs = [main_spec, halo_spec, main_spec, halo_spec,
                    w_spec, w_spec, b_spec, b_spec]
        args = (x_r, x_r, x_i, x_i, wr_flat, wi_flat, br_big, bi_big)
    else:
        in_specs = [main_spec, main_spec, w_spec, w_spec, b_spec, b_spec]
        args = (x_r, x_i, wr_flat, wi_flat, br_big, bi_big)

    kernel = functools.partial(_cconv1d_kernel, K=K, T_L=T_L, L_in=L_in,
                               mask_tail=(padding > 0))

    flops = 2 * N * L_out * (2 * Cout) * (K * C2in)
    bytes_accessed = (2 * N * Cin * L_in * in_bytes
                      + 2 * Cout * K * C2in * in_bytes + 2 * Cout * 4
                      + 2 * N * Cout * L_out * 4)
    vmem_est = _vmem_bytes_per_step(T_L, Cin, Cout, K, in_bytes)
    vmem_limit = int(min(max(32 << 20, 2 * vmem_est), 64 << 20))

    out_r, out_i = pl.pallas_call(
        kernel,
        out_shape=(jax.ShapeDtypeStruct((N, Cout, L_out), jnp.float32),
                   jax.ShapeDtypeStruct((N, Cout, L_out), jnp.float32)),
        grid_spec=pltpu.PrefetchScalarGridSpec(
            num_scalar_prefetch=0,
            grid=(N, n_lt),
            in_specs=in_specs,
            out_specs=(out_spec, out_spec),
        ),
        compiler_params=pltpu.CompilerParams(
            dimension_semantics=("parallel", "parallel"),
            vmem_limit_bytes=vmem_limit),
        cost_estimate=pl.CostEstimate(flops=flops, transcendentals=0,
                                      bytes_accessed=bytes_accessed),
    )(*args)
    return out_r, out_i


def _ref_conv1d(x, w, b, stride, padding):
    """Independent reference: XLA 1-D conv == PyTorch Conv1d (cross-correlation)."""
    y = lax.conv_general_dilated(
        x, w, window_strides=(stride,), padding=((padding, padding),),
        dimension_numbers=('NCH', 'OIH', 'NCH'),
        precision=lax.Precision.HIGHEST)
    return y + b[None, :, None]


def _run_case(case, N, Cin, Cout, K, L, padding, compute_dtype, rtol, atol):
    key = jax.random.fold_in(jax.random.PRNGKey(0), case)
    ks = jax.random.split(key, 6)
    x_r = jax.random.normal(ks[0], (N, Cin, L), jnp.float32)
    x_i = jax.random.normal(ks[1], (N, Cin, L), jnp.float32)
    bound = 1.0 / float(np.sqrt(Cin * K))                # PyTorch-style uniform init
    w_r = jax.random.uniform(ks[2], (Cout, Cin, K), jnp.float32, -bound, bound)
    w_i = jax.random.uniform(ks[3], (Cout, Cin, K), jnp.float32, -bound, bound)
    b_r = jax.random.uniform(ks[4], (Cout,), jnp.float32, -bound, bound)
    b_i = jax.random.uniform(ks[5], (Cout,), jnp.float32, -bound, bound)

    fwd = jax.jit(functools.partial(complex_conv1d, padding=padding,
                                    compute_dtype=compute_dtype))
    out_r, out_i = fwd(x_r, x_i, w_r, w_i, b_r, b_i)
    jax.block_until_ready((out_r, out_i))

    # Reference: same math as the PyTorch module.
    ref_r = _ref_conv1d(x_r, w_r, b_r, 1, padding) - _ref_conv1d(x_i, w_i, b_i, 1, padding)
    ref_i = _ref_conv1d(x_i, w_r, b_r, 1, padding) + _ref_conv1d(x_r, w_i, b_i, 1, padding)
    L_out = L + 2 * padding - K + 1
    assert out_r.shape == out_i.shape == (N, Cout, L_out), out_r.shape
    np.testing.assert_allclose(np.asarray(out_r), np.asarray(ref_r), rtol=rtol, atol=atol)
    np.testing.assert_allclose(np.asarray(out_i), np.asarray(ref_i), rtol=rtol, atol=atol)


if __name__ == "__main__":
    # Module-default-ish case: multi-tile L axis, partial final tile, halo clamp.
    _run_case(0, N=2, Cin=4, Cout=4, K=3, L=300, padding=0,
              compute_dtype=jnp.float32, rtol=2e-4, atol=2e-4)
    # padding > 0 (left pad + in-kernel tail masking), odd channel counts.
    _run_case(1, N=1, Cin=3, Cout=6, K=5, L=700, padding=2,
              compute_dtype=jnp.float32, rtol=2e-4, atol=2e-4)
    # bf16 inputs/weights (v6e/v7x HBM-traffic option), f32 accumulation/outputs.
    _run_case(2, N=1, Cin=8, Cout=8, K=3, L=1024, padding=0,
              compute_dtype=jnp.bfloat16, rtol=5e-2, atol=5e-2)
    # K == 1: no halo pipelines at all.
    _run_case(3, N=2, Cin=4, Cout=5, K=1, L=260, padding=0,
              compute_dtype=jnp.float32, rtol=2e-4, atol=2e-4)
    print("KERNEL_OK")
</pallas_src>

<mosaic_0001>
module attributes {stable_mosaic.version = 11 : i64} {
  func.func @_cconv1d_kernel(%arg0: i32, %arg1: i32, %arg2: memref<1x4x128xf32, #tpu.memory_space<vmem>>, %arg3: memref<1x4x128xf32, #tpu.memory_space<vmem>>, %arg4: memref<1x4x128xf32, #tpu.memory_space<vmem>>, %arg5: memref<1x4x128xf32, #tpu.memory_space<vmem>>, %arg6: memref<4x24xf32, #tpu.memory_space<vmem>>, %arg7: memref<4x24xf32, #tpu.memory_space<vmem>>, %arg8: memref<4x1xf32, #tpu.memory_space<vmem>>, %arg9: memref<4x1xf32, #tpu.memory_space<vmem>>, %arg10: memref<1x4x128xf32, #tpu.memory_space<vmem>>, %arg11: memref<1x4x128xf32, #tpu.memory_space<vmem>>) attributes {dimension_semantics = [#tpu.dimension_semantics<parallel>, #tpu.dimension_semantics<parallel>], iteration_bounds = array<i64: 2, 3>, scalar_prefetch = 0 : i64, scratch_operands = 0 : i64, tpu.core_type = #tpu.core_type<tc>, window_params = [{transform_indices = @transform_0, window_bounds = array<i64: 1, 4, 128>}, {transform_indices = @transform_1, window_bounds = array<i64: 1, 4, 128>}, {transform_indices = @transform_2, window_bounds = array<i64: 1, 4, 128>}, {transform_indices = @transform_3, window_bounds = array<i64: 1, 4, 128>}, {pipeline_mode = #tpu.pipeline_mode<synchronous>, transform_indices = @transform_4, window_bounds = array<i64: 4, 24>}, {pipeline_mode = #tpu.pipeline_mode<synchronous>, transform_indices = @transform_5, window_bounds = array<i64: 4, 24>}, {pipeline_mode = #tpu.pipeline_mode<synchronous>, transform_indices = @transform_6, window_bounds = array<i64: 4, 1>}, {pipeline_mode = #tpu.pipeline_mode<synchronous>, transform_indices = @transform_7, window_bounds = array<i64: 4, 1>}, {transform_indices = @transform_8, window_bounds = array<i64: 1, 4, 128>}, {transform_indices = @transform_9, window_bounds = array<i64: 1, 4, 128>}]} {
    %c0 = arith.constant 0 : index
    %c0_0 = arith.constant 0 : index
    %c0_1 = arith.constant 0 : index
    %0 = vector.load %arg2[%c0, %c0_0, %c0_1] : memref<1x4x128xf32, #tpu.memory_space<vmem>>, vector<1x4x128xf32>
    %1 = vector.shape_cast %0 : vector<1x4x128xf32> to vector<4x128xf32>
    %c0_2 = arith.constant 0 : index
    %c0_3 = arith.constant 0 : index
    %c0_4 = arith.constant 0 : index
    %2 = vector.load %arg4[%c0_2, %c0_3, %c0_4] : memref<1x4x128xf32, #tpu.memory_space<vmem>>, vector<1x4x128xf32>
    %3 = vector.shape_cast %2 : vector<1x4x128xf32> to vector<4x128xf32>
    %c0_5 = arith.constant 0 : index
    %c0_6 = arith.constant 0 : index
    %c0_7 = arith.constant 0 : index
    %4 = vector.load %arg3[%c0_5, %c0_6, %c0_7] : memref<1x4x128xf32, #tpu.memory_space<vmem>>, vector<1x4x2xf32>
    %5 = vector.shape_cast %4 : vector<1x4x2xf32> to vector<4x2xf32>
    %6 = tpu.concatenate %1, %5 in 1 : vector<4x128xf32>, vector<4x2xf32> -> vector<4x130xf32>
    %c0_8 = arith.constant 0 : index
    %c0_9 = arith.constant 0 : index
    %c0_10 = arith.constant 0 : index
    %7 = vector.load %arg5[%c0_8, %c0_9, %c0_10] : memref<1x4x128xf32, #tpu.memory_space<vmem>>, vector<1x4x2xf32>
    %8 = vector.shape_cast %7 : vector<1x4x2xf32> to vector<4x2xf32>
    %9 = tpu.concatenate %3, %8 in 1 : vector<4x128xf32>, vector<4x2xf32> -> vector<4x130xf32>
    %10 = tpu.concatenate %6, %9 in 0 : vector<4x130xf32>, vector<4x130xf32> -> vector<8x130xf32>
    %11 = vector.extract_strided_slice %10 {offsets = [0, 0], sizes = [8, 128], strides = [1, 1]} : vector<8x130xf32> to vector<8x128xf32>
    %12 = vector.extract_strided_slice %10 {offsets = [0, 1], sizes = [8, 128], strides = [1, 1]} : vector<8x130xf32> to vector<8x128xf32>
    %13 = vector.extract_strided_slice %10 {offsets = [0, 2], sizes = [8, 128], strides = [1, 1]} : vector<8x130xf32> to vector<8x128xf32>
    %14 = tpu.concatenate %11, %12, %13 in 0 : vector<8x128xf32>, vector<8x128xf32>, vector<8x128xf32> -> vector<24x128xf32>
    %c0_11 = arith.constant 0 : index
    %c0_12 = arith.constant 0 : index
    %15 = vector.load %arg6[%c0_11, %c0_12] : memref<4x24xf32, #tpu.memory_space<vmem>>, vector<4x24xf32>
    %cst = arith.constant dense<0.000000e+00> : vector<4x128xf32>
    %16 = tpu.matmul %15, %14, %cst {dimension_numbers = #tpu.dot_dimension_numbers<[1], [0], [0], [1], [0, 0, 1, 1], [], []>} : vector<4x24xf32>, vector<24x128xf32>, vector<4x128xf32> -> vector<4x128xf32>
    %c0_13 = arith.constant 0 : index
    %c0_14 = arith.constant 0 : index
    %17 = vector.load %arg7[%c0_13, %c0_14] : memref<4x24xf32, #tpu.memory_space<vmem>>, vector<4x24xf32>
    %cst_15 = arith.constant dense<0.000000e+00> : vector<4x128xf32>
    %18 = tpu.matmul %17, %14, %cst_15 {dimension_numbers = #tpu.dot_dimension_numbers<[1], [0], [0], [1], [0, 0, 1, 1], [], []>} : vector<4x24xf32>, vector<24x128xf32>, vector<4x128xf32> -> vector<4x128xf32>
    %c0_16 = arith.constant 0 : index
    %c0_17 = arith.constant 0 : index
    %19 = vector.load %arg8[%c0_16, %c0_17] : memref<4x1xf32, #tpu.memory_space<vmem>>, vector<4x1xf32>
    %20 = vector.broadcast %19 : vector<4x1xf32> to vector<4x128xf32>
    %21 = arith.addf %16, %20 : vector<4x128xf32>
    %c0_18 = arith.constant 0 : index
    %c0_19 = arith.constant 0 : index
    %c0_20 = arith.constant 0 : index
    %22 = vector.load %arg10[%c0_18, %c0_19, %c0_20] : memref<1x4x128xf32, #tpu.memory_space<vmem>>, vector<1x4x128xf32>
    %23 = vector.shape_cast %22 : vector<1x4x128xf32> to vector<4x128xf32>
    %24 = vector.shape_cast %21 : vector<4x128xf32> to vector<1x4x128xf32>
    tpu.vector_store %arg10[%c0_18, %c0_19, %c0_20], %24 {strides = array<i32>} : memref<1x4x128xf32, #tpu.memory_space<vmem>>, vector<1x4x128xf32>,
    %c0_21 = arith.constant 0 : index
    %c0_22 = arith.constant 0 : index
    %25 = vector.load %arg9[%c0_21, %c0_22] : memref<4x1xf32, #tpu.memory_space<vmem>>, vector<4x1xf32>
    %26 = vector.broadcast %25 : vector<4x1xf32> to vector<4x128xf32>
    %27 = arith.addf %18, %26 : vector<4x128xf32>
    %c0_23 = arith.constant 0 : index
    %c0_24 = arith.constant 0 : index
    %c0_25 = arith.constant 0 : index
    %28 = vector.load %arg11[%c0_23, %c0_24, %c0_25] : memref<1x4x128xf32, #tpu.memory_space<vmem>>, vector<1x4x128xf32>
    %29 = vector.shape_cast %28 : vector<1x4x128xf32> to vector<4x128xf32>
    %30 = vector.shape_cast %27 : vector<4x128xf32> to vector<1x4x128xf32>
    tpu.vector_store %arg11[%c0_23, %c0_24, %c0_25], %30 {strides = array<i32>} : memref<1x4x128xf32, #tpu.memory_space<vmem>>, vector<1x4x128xf32>,
    return
  }
  func.func @transform_0(%arg0: i32, %arg1: i32) -> (i32, i32, i32) {
    %c2_i32 = arith.constant 2 : i32
    %0 = arith.minsi %arg1, %c2_i32 : i32
    %c0_i32 = arith.constant 0 : i32
    %c0_i32_0 = arith.constant 0 : i32
    return %arg0, %c0_i32, %0 : i32, i32, i32
  }
  func.func @transform_1(%arg0: i32, %arg1: i32) -> (i32, i32, i32) {
    %c1_i32 = arith.constant 1 : i32
    %0 = arith.addi %arg1, %c1_i32 : i32
    %c1_i32_0 = arith.constant 1 : i32
    %1 = arith.muli %0, %c1_i32_0 : i32
    %c2_i32 = arith.constant 2 : i32
    %2 = arith.minsi %1, %c2_i32 : i32
    %c0_i32 = arith.constant 0 : i32
    %c0_i32_1 = arith.constant 0 : i32
    return %arg0, %c0_i32, %2 : i32, i32, i32
  }
  func.func @transform_2(%arg0: i32, %arg1: i32) -> (i32, i32, i32) {
    %c2_i32 = arith.constant 2 : i32
    %0 = arith.minsi %arg1, %c2_i32 : i32
    %c0_i32 = arith.constant 0 : i32
    %c0_i32_0 = arith.constant 0 : i32
    return %arg0, %c0_i32, %0 : i32, i32, i32
  }
  func.func @transform_3(%arg0: i32, %arg1: i32) -> (i32, i32, i32) {
    %c1_i32 = arith.constant 1 : i32
    %0 = arith.addi %arg1, %c1_i32 : i32
    %c1_i32_0 = arith.constant 1 : i32
    %1 = arith.muli %0, %c1_i32_0 : i32
    %c2_i32 = arith.constant 2 : i32
    %2 = arith.minsi %1, %c2_i32 : i32
    %c0_i32 = arith.constant 0 : i32
    %c0_i32_1 = arith.constant 0 : i32
    return %arg0, %c0_i32, %2 : i32, i32, i32
  }
  func.func @transform_4(%arg0: i32, %arg1: i32) -> (i32, i32) {
    %c0_i32 = arith.constant 0 : i32
    %c0_i32_0 = arith.constant 0 : i32
    %c0_i32_1 = arith.constant 0 : i32
    return %c0_i32, %c0_i32_0 : i32, i32
  }
  func.func @transform_5(%arg0: i32, %arg1: i32) -> (i32, i32) {
    %c0_i32 = arith.constant 0 : i32
    %c0_i32_0 = arith.constant 0 : i32
    %c0_i32_1 = arith.constant 0 : i32
    return %c0_i32, %c0_i32_0 : i32, i32
  }
  func.func @transform_6(%arg0: i32, %arg1: i32) -> (i32, i32) {
    %c0_i32 = arith.constant 0 : i32
    %c0_i32_0 = arith.constant 0 : i32
    %c0_i32_1 = arith.constant 0 : i32
    return %c0_i32, %c0_i32_0 : i32, i32
  }
  func.func @transform_7(%arg0: i32, %arg1: i32) -> (i32, i32) {
    %c0_i32 = arith.constant 0 : i32
    %c0_i32_0 = arith.constant 0 : i32
    %c0_i32_1 = arith.constant 0 : i32
    return %c0_i32, %c0_i32_0 : i32, i32
  }
  func.func @transform_8(%arg0: i32, %arg1: i32) -> (i32, i32, i32) {
    %c0_i32 = arith.constant 0 : i32
    %c0_i32_0 = arith.constant 0 : i32
    return %arg0, %c0_i32, %arg1 : i32, i32, i32
  }
  func.func @transform_9(%arg0: i32, %arg1: i32) -> (i32, i32, i32) {
    %c0_i32 = arith.constant 0 : i32
    %c0_i32_0 = arith.constant 0 : i32
    return %arg0, %c0_i32, %arg1 : i32, i32, i32
  }
}

</mosaic_0001>

<llo_original>
// kernel: neg.1
$region0: #{neg.1}
  #allocation0 [shape = 's32[1]{0}', space=sflag, size = 0x4, scoped, tag = 'scoped memory for neg.1']
  %s0 = inlined_call_operand.vmem [shape: f32[4,4,3], index: 0, kind: input, shape index: {}]
  %s1 = inlined_call_operand.vmem [shape: f32[4,4,3], index: 1, kind: output, shape index: {}]
  %v2 = vld [vmem:[%s0] sm:$0xf]
  %3 = xla_tuple %v2
  %4 = xla_tuple %3
  %v5 = vxor.u32 %v2, 2147483648
  %6 = xla_tuple %v5
  %7 = vst [vmem:[%s1] sm:$0xf] %v5
  %s8 = scalar_lea.vmem %s0, 4
  %v9 = vld [vmem:[%s8] sm:$0xf]
  %10 = xla_tuple %v9
  %11 = xla_tuple %10
  %v12 = vxor.u32 %v9, 2147483648
  %13 = xla_tuple %v12
  %s14 = scalar_lea.vmem %s1, 4
  %15 = vst [vmem:[%s14] sm:$0xf] %v12
  %s16 = scalar_lea.vmem %s0, 8
  %v17 = vld [vmem:[%s16] sm:$0xf]
  %18 = xla_tuple %v17
  %19 = xla_tuple %18
  %v20 = vxor.u32 %v17, 2147483648
  %21 = xla_tuple %v20
  %s22 = scalar_lea.vmem %s1, 8
  %23 = vst [vmem:[%s22] sm:$0xf] %v20

// kernel: complex_conv1d.1
$region0: #{complex_conv1d.1}
  #allocation0 [shape = 'u32[]', space=smem, size = 0x4, offset = 0x4, fixed_abs, tag = 'smem constant byte address 0x4 - core index']
  #allocation1 [shape = 'u32[144,128]{1,0:T(1,128)}', space=vmem, size = 0x12000, scoped, tag = 'internal scratch']
  %s0 = inlined_call_operand.vmem [shape: f32[2,4,300], index: 0, kind: input, shape index: {}, may-alias: {0,1}]
  %s1 = inlined_call_operand.vmem [shape: f32[2,4,300], index: 1, kind: input, shape index: {}, may-alias: {0,1}]
  %s2 = inlined_call_operand.vmem [shape: f32[2,4,300], index: 2, kind: input, shape index: {}, may-alias: {2,3}]
  %s3 = inlined_call_operand.vmem [shape: f32[2,4,300], index: 3, kind: input, shape index: {}, may-alias: {2,3}]
  %s4 = inlined_call_operand.vmem [shape: f32[4,24], index: 4, kind: input, shape index: {}]
  %s5 = inlined_call_operand.vmem [shape: f32[4,24], index: 5, kind: input, shape index: {}]
  %s6 = inlined_call_operand.vmem [shape: f32[4,1], index: 6, kind: input, shape index: {}]
  %s7 = inlined_call_operand.vmem [shape: f32[4,1], index: 7, kind: input, shape index: {}]
  %s8 = inlined_call_operand.hbm [shape: f32[2,4,298], index: 8, kind: output, shape index: {0}]
  %s9 = inlined_call_operand.hbm [shape: f32[2,4,298], index: 9, kind: output, shape index: {1}]
  %10 = xla_tuple %s8, %s9
  %s11 = sld [smem:[#allocation0]]
  $region73: #{complex_conv1d.1} parent=0
    _
  %s13 = ssub.s32 1, %s11
  %s14 = scalar_select 0, %s13, %s11
  $region1: #{complex_conv1d.1} parent=0
    #allocation2 [shape = 'u8[4096]{0}', space=vmem, size = 0x1000, scoped, tag = 'output window, operand 0']
    #allocation3 [shape = 's32[2]{0}', space=sflag, size = 0x8, scoped, tag = 'scoped memory for complex_conv1d.1']
    #allocation4 [shape = 'u8[4096]{0}', space=vmem, size = 0x1000, scoped, tag = 'output window, operand 1']
    #allocation5 [shape = 's32[2]{0}', space=sflag, size = 0x8, scoped, tag = 'scoped memory for complex_conv1d.1']
    %15 = vsyncpa [#allocation3], 0
    %s16 = scalar_lea.sflag [#allocation3], 1
    %17 = vsyncpa %s16, 0
    %18 = vsyncpa [#allocation5], 0
    %s19 = scalar_lea.sflag [#allocation5], 1
    %20 = vsyncpa %s19, 0
    loop: start=0, step=1, limit=8
    $region2: #{complex_conv1d.1} parent=1 // loop_pre_header
      _
    $region3: #{complex_conv1d.1} parent=1 // loop_header
      %s22 = sphi 0, %s26
      %p23 = scmp.ge.s32.totalorder %s22, 8
      %s29 = sphi 0, %s41
      %s30 = sphi 0, %s37
      %s31 = sphi 0, %s29
      %s32 = sphi 0, %s30
      %s33 = sphi 0, %s31
      %s34 = sphi 0, %s32
      %s50 = sphi 0, %s52
      %s53 = sphi 0, %s50
      %s54 = sphi 0, %s53
      %s70 = sphi 0, %s54
      %s84 = sphi 0, %s86
      %s87 = sphi 0, %s84
      %s88 = sphi 0, %s87
      %s104 = sphi 0, %s88
      %s116 = sphi 0, %s118
      %s119 = sphi 0, %s116
      %s120 = sphi 0, %s119
      %s136 = sphi 0, %s120
      %s150 = sphi 0, %s152
      %s153 = sphi 0, %s150
      %s154 = sphi 0, %s153
      %s170 = sphi 0, %s154
      %s174 = sphi 0, %s174
      %s176 = sphi 0, %s174
      %s177 = sphi 0, %s176
      %s191 = sphi 0, %s177
      %s195 = sphi 0, %s195
      %s197 = sphi 0, %s195
      %s198 = sphi 0, %s197
      %s212 = sphi 0, %s198
      %s216 = sphi 0, %s216
      %s218 = sphi 0, %s216
      %s219 = sphi 0, %s218
      %s233 = sphi 0, %s219
      %s237 = sphi 0, %s237
      %s239 = sphi 0, %s237
      %s240 = sphi 0, %s239
      %s254 = sphi 0, %s240
      %s262 = sphi 0, %s264
      %s265 = sphi 0, %s262
      %s266 = sphi 0, %s265
      %s282 = sphi 0, %s266
      %s290 = sphi 0, %s292
      %s293 = sphi 0, %s290
      %s294 = sphi 0, %s293
      %s310 = sphi 0, %s294
    $region4: #{complex_conv1d.1} parent=1 // loop_header_branch
      %25 = sbr.rel (%p23) target = $region8
    $region5: #{complex_conv1d.1} parent=1 // loop_body
      %s27 = ssub.s32 %s22, 1
      %s28 = ssub.s32 %s22, 2
      %s35 = sadd.s32 1, %s30
      %p36 = scmp.ge.s32.totalorder %s35, 3
      %s37 = scalar_select %p36, 0, %s35
      %s38 = sadd.s32 1, %s29
      %s39 = scalar_select %p36, %s38, %s29
      %p40 = scmp.ge.s32.totalorder %s39, 2
      %s41 = scalar_select %p40, 0, %s39
      %p42 = scmp.lt.s32.totalorder %s30, 2
      %s43 = scalar_select %p42, %s30, 2
      %p44 = scmp.lt.s32.totalorder %s37, 2
      %s45 = scalar_select %p44, %s37, 2
      %s46 = ssub.s32 %s29, %s41
      %s47 = ssub.s32 %s43, %s45
      %s48 = sor.u32 %s46, %s47
      %p49 = scmp.eq.s32.totalorder %s48, 0
      %s51 = sadd.s32 %s50, 1
      %s52 = scalar_select %p49, %s50, %s51
      %p55 = pneg %p49
      %p56 = scmp.eq.s32.totalorder %s22, 5
      %p57 = por %p55, %p56
      %p58 = scmp.ne.s32.totalorder %s50, %s53
      %p59 = scmp.eq.s32.totalorder %s22, 0
      %p60 = por %p58, %p59
      %p61 = scmp.ne.s32.totalorder %s50, %s53
      %p62 = scmp.eq.s32.totalorder %s27, 5
      %p63 = por %p61, %p62
      %p64 = scmp.ne.s32.totalorder %s53, %s54
      %p65 = scmp.eq.s32.totalorder %s27, 0
      %p66 = por %p64, %p65
      %p67 = scmp.ne.s32.totalorder %s53, %s54
      %p68 = scmp.eq.s32.totalorder %s28, 5
      %p69 = por %p67, %p68
      %p71 = scmp.ne.s32.totalorder %s54, %s70
      %p72 = scmp.eq.s32.totalorder %s28, 0
      %p73 = por %p71, %p72
      %s74 = sadd.s32 %s30, 1
      %p75 = scmp.lt.s32.totalorder %s74, 2
      %s76 = scalar_select %p75, %s74, 2
      %s77 = sadd.s32 %s37, 1
      %p78 = scmp.lt.s32.totalorder %s77, 2
      %s79 = scalar_select %p78, %s77, 2
      %s80 = ssub.s32 %s29, %s41
      %s81 = ssub.s32 %s76, %s79
      %s82 = sor.u32 %s80, %s81
      %p83 = scmp.eq.s32.totalorder %s82, 0
      %s85 = sadd.s32 %s84, 1
      %s86 = scalar_select %p83, %s84, %s85
      %p89 = pneg %p83
      %p90 = scmp.eq.s32.totalorder %s22, 5
      %p91 = por %p89, %p90
      %p92 = scmp.ne.s32.totalorder %s84, %s87
      %p93 = scmp.eq.s32.totalorder %s22, 0
      %p94 = por %p92, %p93
      %p95 = scmp.ne.s32.totalorder %s84, %s87
      %p96 = scmp.eq.s32.totalorder %s27, 5
      %p97 = por %p95, %p96
      %p98 = scmp.ne.s32.totalorder %s87, %s88
      %p99 = scmp.eq.s32.totalorder %s27, 0
      %p100 = por %p98, %p99
      %p101 = scmp.ne.s32.totalorder %s87, %s88
      %p102 = scmp.eq.s32.totalorder %s28, 5
      %p103 = por %p101, %p102
      %p105 = scmp.ne.s32.totalorder %s88, %s104
      %p106 = scmp.eq.s32.totalorder %s28, 0
      %p107 = por %p105, %p106
      %p108 = scmp.lt.s32.totalorder %s30, 2
      %s109 = scalar_select %p108, %s30, 2
      %p110 = scmp.lt.s32.totalorder %s37, 2
      %s111 = scalar_select %p110, %s37, 2
      %s112 = ssub.s32 %s29, %s41
      %s113 = ssub.s32 %s109, %s111
      %s114 = sor.u32 %s112, %s113
      %p115 = scmp.eq.s32.totalorder %s114, 0
      %s117 = sadd.s32 %s116, 1
      %s118 = scalar_select %p115, %s116, %s117
      %p121 = pneg %p115
      %p122 = scmp.eq.s32.totalorder %s22, 5
      %p123 = por %p121, %p122
      %p124 = scmp.ne.s32.totalorder %s116, %s119
      %p125 = scmp.eq.s32.totalorder %s22, 0
      %p126 = por %p124, %p125
      %p127 = scmp.ne.s32.totalorder %s116, %s119
      %p128 = scmp.eq.s32.totalorder %s27, 5
      %p129 = por %p127, %p128
      %p130 = scmp.ne.s32.totalorder %s119, %s120
      %p131 = scmp.eq.s32.totalorder %s27, 0
      %p132 = por %p130, %p131
      %p133 = scmp.ne.s32.totalorder %s119, %s120
      %p134 = scmp.eq.s32.totalorder %s28, 5
      %p135 = por %p133, %p134
      %p137 = scmp.ne.s32.totalorder %s120, %s136
      %p138 = scmp.eq.s32.totalorder %s28, 0
      %p139 = por %p137, %p138
      %s140 = sadd.s32 %s30, 1
      %p141 = scmp.lt.s32.totalorder %s140, 2
      %s142 = scalar_select %p141, %s140, 2
      %s143 = sadd.s32 %s37, 1
      %p144 = scmp.lt.s32.totalorder %s143, 2
      %s145 = scalar_select %p144, %s143, 2
      %s146 = ssub.s32 %s29, %s41
      %s147 = ssub.s32 %s142, %s145
      %s148 = sor.u32 %s146, %s147
      %p149 = scmp.eq.s32.totalorder %s148, 0
      %s151 = sadd.s32 %s150, 1
      %s152 = scalar_select %p149, %s150, %s151
      %p155 = pneg %p149
      %p156 = scmp.eq.s32.totalorder %s22, 5
      %p157 = por %p155, %p156
      %p158 = scmp.ne.s32.totalorder %s150, %s153
      %p159 = scmp.eq.s32.totalorder %s22, 0
      %p160 = por %p158, %p159
      %p161 = scmp.ne.s32.totalorder %s150, %s153
      %p162 = scmp.eq.s32.totalorder %s27, 5
      %p163 = por %p161, %p162
      %p164 = scmp.ne.s32.totalorder %s153, %s154
      %p165 = scmp.eq.s32.totalorder %s27, 0
      %p166 = por %p164, %p165
      %p167 = scmp.ne.s32.totalorder %s153, %s154
      %p168 = scmp.eq.s32.totalorder %s28, 5
      %p169 = por %p167, %p168
      %p171 = scmp.ne.s32.totalorder %s154, %s170
      %p172 = scmp.eq.s32.totalorder %s28, 0
      %p173 = por %p171, %p172
      %s175 = sadd.s32 %s174, 1
      %p178 = scmp.eq.s32.totalorder %s22, 5
      %p179 = scmp.ne.s32.totalorder %s174, %s176
      %p180 = scmp.eq.s32.totalorder %s22, 0
      %p181 = por %p179, %p180
      %p182 = scmp.ne.s32.totalorder %s174, %s176
      %p183 = scmp.eq.s32.totalorder %s27, 5
      %p184 = por %p182, %p183
      %p185 = scmp.ne.s32.totalorder %s176, %s177
      %p186 = scmp.eq.s32.totalorder %s27, 0
      %p187 = por %p185, %p186
      %p188 = scmp.ne.s32.totalorder %s176, %s177
      %p189 = scmp.eq.s32.totalorder %s28, 5
      %p190 = por %p188, %p189
      %p192 = scmp.ne.s32.totalorder %s177, %s191
      %p193 = scmp.eq.s32.totalorder %s28, 0
      %p194 = por %p192, %p193
      %s196 = sadd.s32 %s195, 1
      %p199 = scmp.eq.s32.totalorder %s22, 5
      %p200 = scmp.ne.s32.totalorder %s195, %s197
      %p201 = scmp.eq.s32.totalorder %s22, 0
      %p202 = por %p200, %p201
      %p203 = scmp.ne.s32.totalorder %s195, %s197
      %p204 = scmp.eq.s32.totalorder %s27, 5
      %p205 = por %p203, %p204
      %p206 = scmp.ne.s32.totalorder %s197, %s198
      %p207 = scmp.eq.s32.totalorder %s27, 0
      %p208 = por %p206, %p207
      %p209 = scmp.ne.s32.totalorder %s197, %s198
      %p210 = scmp.eq.s32.totalorder %s28, 5
      %p211 = por %p209, %p210
      %p213 = scmp.ne.s32.totalorder %s198, %s212
      %p214 = scmp.eq.s32.totalorder %s28, 0
      %p215 = por %p213, %p214
      %s217 = sadd.s32 %s216, 1
      %p220 = scmp.eq.s32.totalorder %s22, 5
      %p221 = scmp.ne.s32.totalorder %s216, %s218
      %p222 = scmp.eq.s32.totalorder %s22, 0
      %p223 = por %p221, %p222
      %p224 = scmp.ne.s32.totalorder %s216, %s218
      %p225 = scmp.eq.s32.totalorder %s27, 5
      %p226 = por %p224, %p225
      %p227 = scmp.ne.s32.totalorder %s218, %s219
      %p228 = scmp.eq.s32.totalorder %s27, 0
      %p229 = por %p227, %p228
      %p230 = scmp.ne.s32.totalorder %s218, %s219
      %p231 = scmp.eq.s32.totalorder %s28, 5
      %p232 = por %p230, %p231
      %p234 = scmp.ne.s32.totalorder %s219, %s233
      %p235 = scmp.eq.s32.totalorder %s28, 0
      %p236 = por %p234, %p235
      %s238 = sadd.s32 %s237, 1
      %p241 = scmp.eq.s32.totalorder %s22, 5
      %p242 = scmp.ne.s32.totalorder %s237, %s239
      %p243 = scmp.eq.s32.totalorder %s22, 0
      %p244 = por %p242, %p243
      %p245 = scmp.ne.s32.totalorder %s237, %s239
      %p246 = scmp.eq.s32.totalorder %s27, 5
      %p247 = por %p245, %p246
      %p248 = scmp.ne.s32.totalorder %s239, %s240
      %p249 = scmp.eq.s32.totalorder %s27, 0
      %p250 = por %p248, %p249
      %p251 = scmp.ne.s32.totalorder %s239, %s240
      %p252 = scmp.eq.s32.totalorder %s28, 5
      %p253 = por %p251, %p252
      %p255 = scmp.ne.s32.totalorder %s240, %s254
      %p256 = scmp.eq.s32.totalorder %s28, 0
      %p257 = por %p255, %p256
      %s258 = ssub.s32 %s29, %s41
      %s259 = ssub.s32 %s30, %s37
      %s260 = sor.u32 %s258, %s259
      %p261 = scmp.eq.s32.totalorder %s260, 0
      %s263 = sadd.s32 %s262, 1
      %s264 = scalar_select %p261, %s262, %s263
      %p267 = pneg %p261
      %p268 = scmp.eq.s32.totalorder %s22, 5
      %p269 = por %p267, %p268
      %p270 = scmp.ne.s32.totalorder %s262, %s265
      %p271 = scmp.eq.s32.totalorder %s22, 0
      %p272 = por %p270, %p271
      %p273 = scmp.ne.s32.totalorder %s262, %s265
      %p274 = scmp.eq.s32.totalorder %s27, 5
      %p275 = por %p273, %p274
      %p276 = scmp.ne.s32.totalorder %s265, %s266
      %p277 = scmp.eq.s32.totalorder %s27, 0
      %p278 = por %p276, %p277
      %p279 = scmp.ne.s32.totalorder %s265, %s266
      %p280 = scmp.eq.s32.totalorder %s28, 5
      %p281 = por %p279, %p280
      %p283 = scmp.ne.s32.totalorder %s266, %s282
      %p284 = scmp.eq.s32.totalorder %s28, 0
      %p285 = por %p283, %p284
      %s286 = ssub.s32 %s29, %s41
      %s287 = ssub.s32 %s30, %s37
      %s288 = sor.u32 %s286, %s287
      %p289 = scmp.eq.s32.totalorder %s288, 0
      %s291 = sadd.s32 %s290, 1
      %s292 = scalar_select %p289, %s290, %s291
      %p295 = pneg %p289
      %p296 = scmp.eq.s32.totalorder %s22, 5
      %p297 = por %p295, %p296
      %p298 = scmp.ne.s32.totalorder %s290, %s293
      %p299 = scmp.eq.s32.totalorder %s22, 0
      %p300 = por %p298, %p299
      %p301 = scmp.ne.s32.totalorder %s290, %s293
      %p302 = scmp.eq.s32.totalorder %s27, 5
      %p303 = por %p301, %p302
      %p304 = scmp.ne.s32.totalorder %s293, %s294
      %p305 = scmp.eq.s32.totalorder %s27, 0
      %p306 = por %p304, %p305
      %p307 = scmp.ne.s32.totalorder %s293, %s294
      %p308 = scmp.eq.s32.totalorder %s28, 5
      %p309 = por %p307, %p308
      %p311 = scmp.ne.s32.totalorder %s294, %s310
      %p312 = scmp.eq.s32.totalorder %s28, 0
      %p313 = por %p311, %p312
      %p314 = scmp.le.s32.totalorder 1, %s22
      %p315 = scmp.lt.s32.totalorder %s22, 7
      %p316 = pnand %p314, %p315
      %p317 = pneg %p316
      // Predicated region
      $region9: #{complex_conv1d.1} parent=5 // pred_check
        _
      $region10: #{complex_conv1d.1} parent=5 // pred_check_branch
        %319 = sbr.rel (%p316) target = $region12
      $region11: #{complex_conv1d.1} parent=5 // pred_region
        %s320 = ssub.s32 %s22, 1
        // Predicated region
        $region13: #{complex_conv1d.1} parent=11 // pred_check
          %p321 = pneg %p187
        $region14: #{complex_conv1d.1} parent=11 // pred_check_branch
          %323 = sbr.rel (%p321) target = $region16
        $region15: #{complex_conv1d.1} parent=11 // pred_region
          _
        $region16: #{complex_conv1d.1} parent=11 // pred_fallthru
          _
        // Predicated region
        $region17: #{complex_conv1d.1} parent=11 // pred_check
          %p324 = pneg %p208
        $region18: #{complex_conv1d.1} parent=11 // pred_check_branch
          %326 = sbr.rel (%p324) target = $region20
        $region19: #{complex_conv1d.1} parent=11 // pred_region
          _
        $region20: #{complex_conv1d.1} parent=11 // pred_fallthru
          _
        // Predicated region
        $region21: #{complex_conv1d.1} parent=11 // pred_check
          %p327 = pneg %p229
        $region22: #{complex_conv1d.1} parent=11 // pred_check_branch
          %329 = sbr.rel (%p327) target = $region24
        $region23: #{complex_conv1d.1} parent=11 // pred_region
          _
        $region24: #{complex_conv1d.1} parent=11 // pred_fallthru
          _
        // Predicated region
        $region25: #{complex_conv1d.1} parent=11 // pred_check
          %p330 = pneg %p250
        $region26: #{complex_conv1d.1} parent=11 // pred_check_branch
          %332 = sbr.rel (%p330) target = $region28
        $region27: #{complex_conv1d.1} parent=11 // pred_region
          _
        $region28: #{complex_conv1d.1} parent=11 // pred_fallthru
          _
      $region12: #{complex_conv1d.1} parent=5 // pred_fallthru
        _
      %p333 = scmp.lt.s32.totalorder %s22, 6
      // Predicated region
      $region29: #{complex_conv1d.1} parent=5 // pred_check
        %p334 = pneg %p333
      $region30: #{complex_conv1d.1} parent=5 // pred_check_branch
        %336 = sbr.rel (%p334) target = $region32
      $region31: #{complex_conv1d.1} parent=5 // pred_region
        // Predicated region
        $region33: #{complex_conv1d.1} parent=31 // pred_check
          %p337 = pneg %p60
        $region34: #{complex_conv1d.1} parent=31 // pred_check_branch
          %339 = sbr.rel (%p337) target = $region36
        $region35: #{complex_conv1d.1} parent=31 // pred_region
          %p340 = scmp.lt.s32.totalorder %s30, 2
          %s341 = scalar_select %p340, %s30, 2
          %p342 = scmp.lt.s32.totalorder %s29, 1
          %s343 = scalar_select %p342, %s29, 1
          %p344 = scmp.lt.s32.totalorder %s341, 2
          %s345 = scalar_select %p344, %s341, 2
          %s346 = smul.addr %s343, 3
          %s347 = sadd.s32 %s345, %s346
          %s348 = smul.addr %s347, 4
          %s349 = scalar_lea.vmem %s0, %s348
          %p350 = scmp.lt.s32.totalorder %s30, 2
          %s351 = scalar_select %p350, %s30, 2
        $region36: #{complex_conv1d.1} parent=31 // pred_fallthru
          _
        // Predicated region
        $region37: #{complex_conv1d.1} parent=31 // pred_check
          %p352 = pneg %p94
        $region38: #{complex_conv1d.1} parent=31 // pred_check_branch
          %354 = sbr.rel (%p352) target = $region40
        $region39: #{complex_conv1d.1} parent=31 // pred_region
          %s355 = sadd.s32 %s30, 1
          %p356 = scmp.lt.s32.totalorder %s355, 2
          %s357 = scalar_select %p356, %s355, 2
          %p358 = scmp.lt.s32.totalorder %s29, 1
          %s359 = scalar_select %p358, %s29, 1
          %p360 = scmp.lt.s32.totalorder %s357, 2
          %s361 = scalar_select %p360, %s357, 2
          %s362 = smul.addr %s359, 3
          %s363 = sadd.s32 %s361, %s362
          %s364 = smul.addr %s363, 4
          %s365 = scalar_lea.vmem %s1, %s364
          %s366 = sadd.s32 %s30, 1
          %p367 = scmp.lt.s32.totalorder %s366, 2
          %s368 = scalar_select %p367, %s366, 2
        $region40: #{complex_conv1d.1} parent=31 // pred_fallthru
          _
        // Predicated region
        $region41: #{complex_conv1d.1} parent=31 // pred_check
          %p369 = pneg %p126
        $region42: #{complex_conv1d.1} parent=31 // pred_check_branch
          %371 = sbr.rel (%p369) target = $region44
        $region43: #{complex_conv1d.1} parent=31 // pred_region
          %p372 = scmp.lt.s32.totalorder %s30, 2
          %s373 = scalar_select %p372, %s30, 2
          %p374 = scmp.lt.s32.totalorder %s29, 1
          %s375 = scalar_select %p374, %s29, 1
          %p376 = scmp.lt.s32.totalorder %s373, 2
          %s377 = scalar_select %p376, %s373, 2
          %s378 = smul.addr %s375, 3
          %s379 = sadd.s32 %s377, %s378
          %s380 = smul.addr %s379, 4
          %s381 = scalar_lea.vmem %s2, %s380
          %p382 = scmp.lt.s32.totalorder %s30, 2
          %s383 = scalar_select %p382, %s30, 2
        $region44: #{complex_conv1d.1} parent=31 // pred_fallthru
          _
        // Predicated region
        $region45: #{complex_conv1d.1} parent=31 // pred_check
          %p384 = pneg %p160
        $region46: #{complex_conv1d.1} parent=31 // pred_check_branch
          %386 = sbr.rel (%p384) target = $region48
        $region47: #{complex_conv1d.1} parent=31 // pred_region
          %s387 = sadd.s32 %s30, 1
          %p388 = scmp.lt.s32.totalorder %s387, 2
          %s389 = scalar_select %p388, %s387, 2
          %p390 = scmp.lt.s32.totalorder %s29, 1
          %s391 = scalar_select %p390, %s29, 1
          %p392 = scmp.lt.s32.totalorder %s389, 2
          %s393 = scalar_select %p392, %s389, 2
          %s394 = smul.addr %s391, 3
          %s395 = sadd.s32 %s393, %s394
          %s396 = smul.addr %s395, 4
          %s397 = scalar_lea.vmem %s3, %s396
          %s398 = sadd.s32 %s30, 1
          %p399 = scmp.lt.s32.totalorder %s398, 2
          %s400 = scalar_select %p399, %s398, 2
        $region48: #{complex_conv1d.1} parent=31 // pred_fallthru
          _
      $region32: #{complex_conv1d.1} parent=5 // pred_fallthru
        _
      %p401 = scmp.le.s32.totalorder 1, %s22
      %p402 = scmp.lt.s32.totalorder %s22, 7
      %p403 = pnand %p401, %p402
      %p404 = pneg %p403
      // Predicated region
      $region49: #{complex_conv1d.1} parent=5 // pred_check
        _
      $region50: #{complex_conv1d.1} parent=5 // pred_check_branch
        %406 = sbr.rel (%p403) target = $region52
      $region51: #{complex_conv1d.1} parent=5 // pred_region
        %s407 = ssub.s32 %s22, 1
        %p408 = scmp.lt.s32.totalorder %s32, 2
        %s409 = scalar_select %p408, %s32, 2
        %p410 = scmp.lt.s32.totalorder %s31, 1
        %s411 = scalar_select %p410, %s31, 1
        %p412 = scmp.lt.s32.totalorder %s409, 2
        %s413 = scalar_select %p412, %s409, 2
        %s414 = smul.addr %s411, 3
        %s415 = sadd.s32 %s413, %s414
        %s416 = smul.addr %s415, 4
        %s417 = scalar_lea.vmem %s0, %s416
        %p418 = pneg %p66
        %p419 = pneg %p63
        %s420 = sadd.s32 %s32, 1
        %p421 = scmp.lt.s32.totalorder %s420, 2
        %s422 = scalar_select %p421, %s420, 2
        %p423 = scmp.lt.s32.totalorder %s31, 1
        %s424 = scalar_select %p423, %s31, 1
        %p425 = scmp.lt.s32.totalorder %s422, 2
        %s426 = scalar_select %p425, %s422, 2
        %s427 = smul.addr %s424, 3
        %s428 = sadd.s32 %s426, %s427
        %s429 = smul.addr %s428, 4
        %s430 = scalar_lea.vmem %s1, %s429
        %p431 = pneg %p100
        %p432 = pneg %p97
        %p433 = scmp.lt.s32.totalorder %s32, 2
        %s434 = scalar_select %p433, %s32, 2
        %p435 = scmp.lt.s32.totalorder %s31, 1
        %s436 = scalar_select %p435, %s31, 1
        %p437 = scmp.lt.s32.totalorder %s434, 2
        %s438 = scalar_select %p437, %s434, 2
        %s439 = smul.addr %s436, 3
        %s440 = sadd.s32 %s438, %s439
        %s441 = smul.addr %s440, 4
        %s442 = scalar_lea.vmem %s2, %s441
        %p443 = pneg %p132
        %p444 = pneg %p129
        %s445 = sadd.s32 %s32, 1
        %p446 = scmp.lt.s32.totalorder %s445, 2
        %s447 = scalar_select %p446, %s445, 2
        %p448 = scmp.lt.s32.totalorder %s31, 1
        %s449 = scalar_select %p448, %s31, 1
        %p450 = scmp.lt.s32.totalorder %s447, 2
        %s451 = scalar_select %p450, %s447, 2
        %s452 = smul.addr %s449, 3
        %s453 = sadd.s32 %s451, %s452
        %s454 = smul.addr %s453, 4
        %s455 = scalar_lea.vmem %s3, %s454
        %p456 = pneg %p166
        %p457 = pneg %p163
        %p458 = pneg %p187
        %p459 = pneg %p184
        %p460 = pneg %p208
        %p461 = pneg %p205
        %p462 = pneg %p229
        %p463 = pneg %p226
        %p464 = pneg %p250
        %p465 = pneg %p247
        %p466 = pneg %p278
        %p467 = pneg %p275
        %s468 = sand.u32 %s265, 1
        %s469 = scalar_lea.sflag [#allocation3], %s468
        %s470 = sand.u32 %s265, 1
        %s471 = smul.addr %s470, 4
        %s472 = scalar_lea.vmem [#allocation2], %s471
        %p473 = pneg %p306
        %p474 = pneg %p303
        %s475 = sand.u32 %s293, 1
        %s476 = scalar_lea.sflag [#allocation5], %s475
        %s477 = sand.u32 %s293, 1
        %s478 = smul.addr %s477, 4
        %s479 = scalar_lea.vmem [#allocation4], %s478
        %p480 = scmp.lt.s32.totalorder %s32, 2
        %s481 = scalar_select %p480, %s32, 2
        %p482 = scmp.lt.s32.totalorder %s31, 1
        %s483 = scalar_select %p482, %s31, 1
        %p484 = scmp.lt.s32.totalorder %s481, 2
        %s485 = scalar_select %p484, %s481, 2
        %s486 = smul.addr %s483, 3
        %s487 = sadd.s32 %s485, %s486
        %s488 = smul.addr %s487, 4
        %s489 = scalar_lea.vmem %s0, %s488
        %p490 = scmp.lt.s32.totalorder %s32, 2
        %s491 = scalar_select %p490, %s32, 2
        %s492 = sadd.s32 %s32, 1
        %p493 = scmp.lt.s32.totalorder %s492, 2
        %s494 = scalar_select %p493, %s492, 2
        %p495 = scmp.lt.s32.totalorder %s31, 1
        %s496 = scalar_select %p495, %s31, 1
        %p497 = scmp.lt.s32.totalorder %s494, 2
        %s498 = scalar_select %p497, %s494, 2
        %s499 = smul.addr %s496, 3
        %s500 = sadd.s32 %s498, %s499
        %s501 = smul.addr %s500, 4
        %s502 = scalar_lea.vmem %s1, %s501
        %s503 = sadd.s32 %s32, 1
        %p504 = scmp.lt.s32.totalorder %s503, 2
        %s505 = scalar_select %p504, %s503, 2
        %p506 = scmp.lt.s32.totalorder %s32, 2
        %s507 = scalar_select %p506, %s32, 2
        %p508 = scmp.lt.s32.totalorder %s31, 1
        %s509 = scalar_select %p508, %s31, 1
        %p510 = scmp.lt.s32.totalorder %s507, 2
        %s511 = scalar_select %p510, %s507, 2
        %s512 = smul.addr %s509, 3
        %s513 = sadd.s32 %s511, %s512
        %s514 = smul.addr %s513, 4
        %s515 = scalar_lea.vmem %s2, %s514
        %p516 = scmp.lt.s32.totalorder %s32, 2
        %s517 = scalar_select %p516, %s32, 2
        %s518 = sadd.s32 %s32, 1
        %p519 = scmp.lt.s32.totalorder %s518, 2
        %s520 = scalar_select %p519, %s518, 2
        %p521 = scmp.lt.s32.totalorder %s31, 1
        %s522 = scalar_select %p521, %s31, 1
        %p523 = scmp.lt.s32.totalorder %s520, 2
        %s524 = scalar_select %p523, %s520, 2
        %s525 = smul.addr %s522, 3
        %s526 = sadd.s32 %s524, %s525
        %s527 = smul.addr %s526, 4
        %s528 = scalar_lea.vmem %s3, %s527
        %s529 = sadd.s32 %s32, 1
        %p530 = scmp.lt.s32.totalorder %s529, 2
        %s531 = scalar_select %p530, %s529, 2
        %v532 = vld [vmem:[%s489] sm:$0xf]
        %v533 = vld [vmem:[%s515] sm:$0xf]
        %v534 = vld [vmem:[%s502] sm:$0xf]
        %v535 = vld [vmem:[%s528] sm:$0xf]
        %v538 = vrot.slane %v533, 4
        %v539 = vrot.slane %v535, 4
        %vm542 = vcmask 1043456
        %v543 = vsel %vm542, %v532, %v538
        %v544 = vsel %vm542, %v534, %v539
        %547 = vrot.lane.b32.xlu0 %v543, 127
        %v548 = vpop.permute.xlu0 %547
        %549 = vrot.lane.b32.xlu0 %v544, 127
        %v550 = vpop.permute.xlu0 %549
        %vm551 = vcmask 1039360
        %v552 = vsel %vm551, %v548, %v550
        %554 = vrot.lane.b32.xlu0 %v543, 126
        %v555 = vpop.permute.xlu0 %554
        %556 = vrot.lane.b32.xlu0 %v544, 126
        %v557 = vpop.permute.xlu0 %556
        %vm558 = vcmask 1031168
        %v559 = vsel %vm558, %v555, %v557
        %v561 = vld [vmem:[%s4] sm:$0xf]
        %v562 = vld [vmem:[%s5] sm:$0xf]
        %v563 = vld [vmem:[%s6] sm:$0xf]
        %565 = vset.pattern.permute.xlu0 0
        %566 = vperm.xlu0 %565, %v563
        %v567 = vpop.permute.xlu0 %566
        %vm569 = vcmask 195584
        %v571 = vsel %vm569, %v561, 0
        %573 = vmatprep.subr.mxu0 0.0
        %574 = vmatpush1.msra.mxu0 0.0
        %575 = vmatprep.subr.mxu0 0.0
        %576 = vmatpush1.msra.mxu0 0.0
        %577 = vmatprep.subr.mxu0 0.0
        %578 = vmatpush1.msra.mxu0 0.0
        %579 = vmatprep.subr.mxu0 0.0
        %580 = vmatpush1.msra.mxu0 0.0
        %581 = vmatprep.subr.mxu0 0.0
        %582 = vmatpush1.msra.mxu0 0.0
        %583 = vmatprep.subr.mxu0 0.0
        %584 = vmatpush1.msra.mxu0 0.0
        %585 = vmatprep.subr.mxu0 0.0
        %586 = vmatpush1.msra.mxu0 0.0
        %587 = vmatprep.subr.mxu0 0.0
        %588 = vmatpush1.msra.mxu0 0.0
        %589 = vmatprep.subr.mxu0 0.0
        %590 = vmatpush1.msra.mxu0 0.0
        %591 = vmatprep.subr.mxu0 0.0
        %592 = vmatpush1.msra.mxu0 0.0
        %593 = vmatprep.subr.mxu0 0.0
        %594 = vmatpush1.msra.mxu0 0.0
        %595 = vmatprep.subr.mxu0 0.0
        %596 = vmatpush1.msra.mxu0 0.0
        %597 = vmatprep.subr.mxu0 0.0
        %598 = vmatpush1.msra.mxu0 0.0
        %599 = vmatprep.subr.mxu0 0.0
        %600 = vmatpush1.msra.mxu0 %v559
        %601 = vmatprep.subr.mxu0 0.0
        %602 = vmatpush1.msra.mxu0 %v552
        %603 = vmatprep.subr.mxu0 0.0
        %604 = vmatpush1.msra.mxu0 %v543
        %605 = vmatprep.subr.mxu0 0.0
        %606 = vmatpush2.msra.mxu0 0.0
        %607 = vmatprep.subr.mxu0 0.0
        %608 = vmatpush2.msra.mxu0 0.0
        %609 = vmatprep.subr.mxu0 0.0
        %610 = vmatpush2.msra.mxu0 0.0
        %611 = vmatprep.subr.mxu0 0.0
        %612 = vmatpush2.msra.mxu0 0.0
        %613 = vmatprep.subr.mxu0 0.0
        %614 = vmatpush2.msra.mxu0 0.0
        %615 = vmatprep.subr.mxu0 0.0
        %616 = vmatpush2.msra.mxu0 0.0
        %617 = vmatprep.subr.mxu0 0.0
        %618 = vmatpush2.msra.mxu0 0.0
        %619 = vmatprep.subr.mxu0 0.0
        %620 = vmatpush2.msra.mxu0 0.0
        %621 = vmatprep.subr.mxu0 0.0
        %622 = vmatpush2.msra.mxu0 0.0
        %623 = vmatprep.subr.mxu0 0.0
        %624 = vmatpush2.msra.mxu0 0.0
        %625 = vmatprep.subr.mxu0 0.0
        %626 = vmatpush2.msra.mxu0 0.0
        %627 = vmatprep.subr.mxu0 0.0
        %628 = vmatpush2.msra.mxu0 0.0
        %629 = vmatprep.subr.mxu0 0.0
        %630 = vmatpush2.msra.mxu0 0.0
        %631 = vmatprep.subr.mxu0 0.0
        %632 = vmatpush2.msra.mxu0 0.0
        %633 = vmatprep.subr.mxu0 0.0
        %634 = vmatpush2.msra.mxu0 0.0
        %635 = vmatprep.subr.mxu0 0.0
        %636 = vmatpush2.msra.mxu0 0.0
        %637 = vmatprep.mubr.f32.mxu0 0.0
        %638 = vmatmul.mubr.f32.gmra.mxu0 %v571
        %v639 = vpop.f32.mrf.mxu0
        %v640 = vadd.f32 %v567, %v639
        %v641 = vpop.f32.mrf.mxu0
        %642 = vdwg.mxu0
        %643 = vst [vmem:[%s472] sm:$0xf] %v640
        %v644 = vld [vmem:[%s7] sm:$0xf]
        %646 = vset.pattern.permute.xlu0 0
        %647 = vperm.xlu0 %646, %v644
        %v648 = vpop.permute.xlu0 %647
        %v651 = vsel %vm569, %v562, 0
        %653 = vmatprep.subr.mxu0 0.0
        %654 = vmatpush1.msra.mxu0 0.0
        %655 = vmatprep.subr.mxu0 0.0
        %656 = vmatpush1.msra.mxu0 0.0
        %657 = vmatprep.subr.mxu0 0.0
        %658 = vmatpush1.msra.mxu0 0.0
        %659 = vmatprep.subr.mxu0 0.0
        %660 = vmatpush1.msra.mxu0 0.0
        %661 = vmatprep.subr.mxu0 0.0
        %662 = vmatpush1.msra.mxu0 0.0
        %663 = vmatprep.subr.mxu0 0.0
        %664 = vmatpush1.msra.mxu0 0.0
        %665 = vmatprep.subr.mxu0 0.0
        %666 = vmatpush1.msra.mxu0 0.0
        %667 = vmatprep.subr.mxu0 0.0
        %668 = vmatpush1.msra.mxu0 0.0
        %669 = vmatprep.subr.mxu0 0.0
        %670 = vmatpush1.msra.mxu0 0.0
        %671 = vmatprep.subr.mxu0 0.0
        %672 = vmatpush1.msra.mxu0 0.0
        %673 = vmatprep.subr.mxu0 0.0
        %674 = vmatpush1.msra.mxu0 0.0
        %675 = vmatprep.subr.mxu0 0.0
        %676 = vmatpush1.msra.mxu0 0.0
        %677 = vmatprep.subr.mxu0 0.0
        %678 = vmatpush1.msra.mxu0 0.0
        %679 = vmatprep.subr.mxu0 0.0
        %680 = vmatpush1.msra.mxu0 %v559
        %681 = vmatprep.subr.mxu0 0.0
        %682 = vmatpush1.msra.mxu0 %v552
        %683 = vmatprep.subr.mxu0 0.0
        %684 = vmatpush1.msra.mxu0 %v543
        %685 = vmatprep.subr.mxu0 0.0
        %686 = vmatpush2.msra.mxu0 0.0
        %687 = vmatprep.subr.mxu0 0.0
        %688 = vmatpush2.msra.mxu0 0.0
        %689 = vmatprep.subr.mxu0 0.0
        %690 = vmatpush2.msra.mxu0 0.0
        %691 = vmatprep.subr.mxu0 0.0
        %692 = vmatpush2.msra.mxu0 0.0
        %693 = vmatprep.subr.mxu0 0.0
        %694 = vmatpush2.msra.mxu0 0.0
        %695 = vmatprep.subr.mxu0 0.0
        %696 = vmatpush2.msra.mxu0 0.0
        %697 = vmatprep.subr.mxu0 0.0
        %698 = vmatpush2.msra.mxu0 0.0
        %699 = vmatprep.subr.mxu0 0.0
        %700 = vmatpush2.msra.mxu0 0.0
        %701 = vmatprep.subr.mxu0 0.0
        %702 = vmatpush2.msra.mxu0 0.0
        %703 = vmatprep.subr.mxu0 0.0
        %704 = vmatpush2.msra.mxu0 0.0
        %705 = vmatprep.subr.mxu0 0.0
        %706 = vmatpush2.msra.mxu0 0.0
        %707 = vmatprep.subr.mxu0 0.0
        %708 = vmatpush2.msra.mxu0 0.0
        %709 = vmatprep.subr.mxu0 0.0
        %710 = vmatpush2.msra.mxu0 0.0
        %711 = vmatprep.subr.mxu0 0.0
        %712 = vmatpush2.msra.mxu0 0.0
        %713 = vmatprep.subr.mxu0 0.0
        %714 = vmatpush2.msra.mxu0 0.0
        %715 = vmatprep.subr.mxu0 0.0
        %716 = vmatpush2.msra.mxu0 0.0
        %717 = vmatprep.mubr.f32.mxu0 0.0
        %718 = vmatmul.mubr.f32.gmra.mxu0 %v651
        %v719 = vpop.f32.mrf.mxu0
        %v720 = vadd.f32 %v648, %v719
        %v721 = vpop.f32.mrf.mxu0
        %722 = vdwg.mxu0
        %723 = vst [vmem:[%s479] sm:$0xf] %v720
        %s724 = sand.u32 %s265, 1
        %s725 = scalar_lea.sflag [#allocation3], %s724
        %s726 = sand.u32 %s265, 1
        %s727 = smul.addr %s726, 4
        %s728 = scalar_lea.vmem [#allocation2], %s727
        %s729 = sand.u32 %s293, 1
        %s730 = scalar_lea.sflag [#allocation5], %s729
        %s731 = sand.u32 %s293, 1
        %s732 = smul.addr %s731, 4
        %s733 = scalar_lea.vmem [#allocation4], %s732
        // Predicated region
        $region53: #{complex_conv1d.1} parent=51 // pred_check
          %p734 = pneg %p275
        $region54: #{complex_conv1d.1} parent=51 // pred_check_branch
          %736 = sbr.rel (%p734) target = $region56
        $region55: #{complex_conv1d.1} parent=51 // pred_region
          %s738 = ssub.s32 64, 64
          %739 = vsyncadd %s725, %s738
          %s740 = smul.addr %s31, 3
          %s741 = sadd.s32 %s32, %s740
          %s742 = smul.addr %s741, 64
          %s743 = scalar_lea.hbm %s8, %s742
          %s745 = sshll.u32 %s728, 4
          %s746 = int_to_ptr.vmem [resolvable:$true] %s745
          %748 = dma.vmem_to_hbm [thread:$0]  %s746, 64, %s743, %s725
        $region56: #{complex_conv1d.1} parent=51 // pred_fallthru
          _
        // Predicated region
        $region57: #{complex_conv1d.1} parent=51 // pred_check
          %p749 = pneg %p303
        $region58: #{complex_conv1d.1} parent=51 // pred_check_branch
          %751 = sbr.rel (%p749) target = $region60
        $region59: #{complex_conv1d.1} parent=51 // pred_region
          %s753 = ssub.s32 64, 64
          %754 = vsyncadd %s730, %s753
          %s755 = smul.addr %s31, 3
          %s756 = sadd.s32 %s32, %s755
          %s757 = smul.addr %s756, 64
          %s758 = scalar_lea.hbm %s9, %s757
          %s760 = sshll.u32 %s733, 4
          %s761 = int_to_ptr.vmem [resolvable:$true] %s760
          %763 = dma.vmem_to_hbm [thread:$0]  %s761, 64, %s758, %s730
        $region60: #{complex_conv1d.1} parent=51 // pred_fallthru
          _
      $region52: #{complex_conv1d.1} parent=5 // pred_fallthru
        _
      %p764 = scmp.le.s32.totalorder 2, %s22
      // Predicated region
      $region61: #{complex_conv1d.1} parent=5 // pred_check
        %p765 = pneg %p764
      $region62: #{complex_conv1d.1} parent=5 // pred_check_branch
        %767 = sbr.rel (%p765) target = $region64
      $region63: #{complex_conv1d.1} parent=5 // pred_region
        %s768 = ssub.s32 %s22, 2
        // Predicated region
        $region65: #{complex_conv1d.1} parent=63 // pred_check
          %p769 = pneg %p281
        $region66: #{complex_conv1d.1} parent=63 // pred_check_branch
          %771 = sbr.rel (%p769) target = $region68
        $region67: #{complex_conv1d.1} parent=63 // pred_region
          %s772 = sand.u32 %s266, 1
          %s773 = scalar_lea.sflag [#allocation3], %s772
          %s774 = sand.u32 %s266, 1
          %s775 = smul.addr %s774, 4
          %s776 = scalar_lea.vmem [#allocation2], %s775
          %777 = dma.done %s773, 64
        $region68: #{complex_conv1d.1} parent=63 // pred_fallthru
          _
        // Predicated region
        $region69: #{complex_conv1d.1} parent=63 // pred_check
          %p778 = pneg %p309
        $region70: #{complex_conv1d.1} parent=63 // pred_check_branch
          %780 = sbr.rel (%p778) target = $region72
        $region71: #{complex_conv1d.1} parent=63 // pred_region
          %s781 = sand.u32 %s294, 1
          %s782 = scalar_lea.sflag [#allocation5], %s781
          %s783 = sand.u32 %s294, 1
          %s784 = smul.addr %s783, 4
          %s785 = scalar_lea.vmem [#allocation4], %s784
          %786 = dma.done %s782, 64
        $region72: #{complex_conv1d.1} parent=63 // pred_fallthru
          _
      $region64: #{complex_conv1d.1} parent=5 // pred_fallthru
        _
    $region6: #{complex_conv1d.1} parent=1 // loop_footer
      %s26 = sadd.s32 1, %s22
    $region7: #{complex_conv1d.1} parent=1 // loop_footer_branch
      %21 = sbr.rel target = $region3
    $region8: #{complex_conv1d.1} parent=1 // loop_exit
      _
    %787 = vsyncpa [#allocation3], 1
    %s788 = scalar_lea.sflag [#allocation3], 1
    %789 = vsyncpa %s788, 1
    %790 = vsyncpa [#allocation5], 1
    %s791 = scalar_lea.sflag [#allocation5], 1
    %792 = vsyncpa %s791, 1

</llo_original>
